<compile_context>
chip_gen: v5e
topology: v5e:2x2
jax: 0.10.0
libtpu: 0.0.40
codegen_flags: <defaults>
</compile_context>

<pallas_src>
import math

import jax
import jax.numpy as jnp
from jax.experimental import pallas as pl
from jax.experimental.pallas import tpu as pltpu

PAD_IDX = 0   # textual.padding_idx  (CrossEntropyLoss ignore_index)
SOS_IDX = 1
EOS_IDX = 2


def _captioning_block_kernel(vis_ref, emb_ref, tgt_ref,
                             wq_ref, wk_ref, wv_ref, wo_ref,
                             out_ref):
    """One block of Bb captions per grid step (batch axis is 'parallel').

    vis_ref : (Bb, Nv, C)   bf16 visual tokens (channels on lanes)
    emb_ref : (Bb, T, H)    bf16 embedded tgt_input
    tgt_ref : (1, Bb*T, 1)  int32 tgt_output token ids
    w*_ref  : bf16 weights (constant block index -> resident, no per-step DMA)
    out_ref : (1, 8, 128)   f32 per-block partials; [0,0,0]=sum NLL, [0,1,0]=valid count
    """
    Bb, Nv, C = vis_ref.shape
    _, T, H = emb_ref.shape
    V = wo_ref.shape[1]
    Mb = Bb * T

    x_bf = emb_ref[...]                               # (Bb, T, H) bf16
    vis_flat = vis_ref[...].reshape(Bb * Nv, C)       # (Bb*Nv, C) bf16

    # projections on the MXU: bf16 operands, f32 accumulation
    q = jnp.dot(x_bf.reshape(Mb, H), wq_ref[...],
                preferred_element_type=jnp.float32).reshape(Bb, T, H)
    k = jnp.dot(vis_flat, wk_ref[...],
                preferred_element_type=jnp.float32).reshape(Bb, Nv, H)
    v = jnp.dot(vis_flat, wv_ref[...],
                preferred_element_type=jnp.float32).reshape(Bb, Nv, H)

    # cross-attention of caption tokens over visual tokens; softmax math in f32
    scale = 1.0 / math.sqrt(H)
    q_bf = (q * scale).astype(jnp.bfloat16)           # fold scale into q (T*H, not T*Nv)
    scores = jnp.einsum("bth,bnh->btn", q_bf, k.astype(jnp.bfloat16),
                        preferred_element_type=jnp.float32)       # (Bb, T, Nv)
    smax = jnp.max(scores, axis=-1, keepdims=True)
    p = jnp.exp(scores - smax)
    attn = p * pl.reciprocal(jnp.sum(p, axis=-1, keepdims=True), approx=True)
    ctx = jnp.einsum("btn,bnh->bth", attn.astype(jnp.bfloat16),
                     v.astype(jnp.bfloat16),
                     preferred_element_type=jnp.float32)          # (Bb, T, H)

    h = x_bf.astype(jnp.float32) + ctx                            # residual, f32
    logits = jnp.dot(h.reshape(Mb, H).astype(jnp.bfloat16), wo_ref[...],
                     preferred_element_type=jnp.float32)          # (Mb, V)

    # log-softmax over vocab + masked NLL (== CrossEntropyLoss(ignore_index=pad))
    lmax = jnp.max(logits, axis=-1, keepdims=True)
    lse = jnp.log(jnp.sum(jnp.exp(logits - lmax), axis=-1, keepdims=True)) + lmax
    logp = logits - lse                                           # (Mb, V)

    tgt = tgt_ref[0]                                              # (Mb, 1) int32
    col = jax.lax.broadcasted_iota(jnp.int32, (Mb, V), 1)
    valid = tgt != PAD_IDX                                        # (Mb, 1) bool
    pick = (col == tgt) & valid                                   # (Mb, V) bool
    loss_sum = -jnp.sum(jnp.where(pick, logp, 0.0))
    count = jnp.sum(valid.astype(jnp.float32))

    # one (8,128) tile write per block; no cross-step accumulation, so the batch
    # grid axis can be "parallel" (sharded across TensorCores on v7x).
    row = jax.lax.broadcasted_iota(jnp.int32, (8, 128), 0)
    cl = jax.lax.broadcasted_iota(jnp.int32, (8, 128), 1)
    tile = (jnp.where((row == 0) & (cl == 0), loss_sum, 0.0)
            + jnp.where((row == 1) & (cl == 0), count, 0.0))
    out_ref[0] = tile


def init_params(key, vocab_size, hidden, channels):
    ks = jax.random.split(key, 5)
    embed = jax.random.normal(ks[0], (vocab_size, hidden), jnp.float32) * 0.02
    embed = embed.at[PAD_IDX].set(0.0)   # nn.Embedding(padding_idx=...) semantics
    wq = jax.random.normal(ks[1], (hidden, hidden), jnp.float32) / math.sqrt(hidden)
    wk = jax.random.normal(ks[2], (channels, hidden), jnp.float32) / math.sqrt(channels)
    wv = jax.random.normal(ks[3], (channels, hidden), jnp.float32) / math.sqrt(channels)
    wo = jax.random.normal(ks[4], (hidden, vocab_size), jnp.float32) / math.sqrt(hidden)
    return dict(embed=embed, wq=wq, wk=wk, wv=wv, wo=wo)


def captioning_model_forward(params, batch, *, batch_block=None):
    """Equivalent of CaptioningModel.forward for the training path (caption_tokens given)."""
    image = batch["image"]                         # (B, C, Hs, Ws)  NCHW
    B, C, Hs, Ws = image.shape
    Nv = Hs * Ws

    caption_tokens = batch["caption_tokens"]       # (B, L) int32
    T = caption_tokens.shape[1] - 1

    # pick a batch block so Bb*T ~ 128 rows feed the MXU; pad B to a multiple of Bb
    Bb = batch_block if batch_block is not None else max(1, 128 // max(T, 1))
    Bb = max(1, min(Bb, B))
    num_blocks = pl.cdiv(B, Bb)
    B_pad = num_blocks * Bb
    if B_pad != B:
        image = jnp.pad(image, ((0, B_pad - B), (0, 0), (0, 0), (0, 0)))
        caption_tokens = jnp.pad(caption_tokens, ((0, B_pad - B), (0, 0)),
                                 constant_values=PAD_IDX)

    vis = image.reshape(B_pad, C, Nv).transpose(0, 2, 1)   # (B_pad, Nv, C), channels on lanes
    tgt_input = caption_tokens[:, :-1]                     # (B_pad, T)
    tgt_output = caption_tokens[:, 1:]                     # (B_pad, T)

    V, H = params["embed"].shape
    emb = jnp.take(params["embed"], tgt_input, axis=0)     # (B_pad, T, H)  glue gather

    # bf16 operands halve HBM->VMEM DMA bytes and hit the native bf16 MXU path;
    # all in-kernel accumulation / softmax math stays f32.
    vis_bf = vis.astype(jnp.bfloat16)
    emb_bf = emb.astype(jnp.bfloat16)
    wq = params["wq"].astype(jnp.bfloat16)
    wk = params["wk"].astype(jnp.bfloat16)
    wv = params["wv"].astype(jnp.bfloat16)
    wo = params["wo"].astype(jnp.bfloat16)

    # target ids, no dense one-hot: (num_blocks, Bb*T, 1) int32
    tgt_blk = tgt_output.reshape(num_blocks, Bb * T, 1).astype(jnp.int32)

    out = pl.pallas_call(
        _captioning_block_kernel,
        out_shape=jax.ShapeDtypeStruct((num_blocks, 8, 128), jnp.float32),
        grid_spec=pltpu.PrefetchScalarGridSpec(
            num_scalar_prefetch=0,
            grid=(num_blocks,),
            in_specs=[
                pl.BlockSpec((Bb, Nv, C), lambda b: (b, 0, 0)),
                pl.BlockSpec((Bb, T, H), lambda b: (b, 0, 0)),
                pl.BlockSpec((1, Bb * T, 1), lambda b: (b, 0, 0)),
                pl.BlockSpec((H, H), lambda b: (0, 0)),
                pl.BlockSpec((C, H), lambda b: (0, 0)),
                pl.BlockSpec((C, H), lambda b: (0, 0)),
                pl.BlockSpec((H, V), lambda b: (0, 0)),
            ],
            out_specs=pl.BlockSpec((1, 8, 128), lambda b: (b, 0, 0)),
        ),
        compiler_params=pltpu.CompilerParams(
            dimension_semantics=("parallel",)),   # per-block partials -> shardable grid axis
    )(vis_bf, emb_bf, tgt_blk, wq, wk, wv, wo)

    loss = jnp.sum(out[:, 0, 0]) / jnp.maximum(jnp.sum(out[:, 1, 0]), 1.0)
    # TODO(synk): inference path (beam-search / nucleus-sampling decoder) and the
    # caption_backward cloned head are not implemented in this synthetic kernel.
    return {"loss": loss, "loss_components": {"captioning_forward": loss}}


def _reference_loss(params, batch):
    """Pure-JAX f32 reference of the same textual head, for correctness check."""
    image = batch["image"]
    B, C, Hs, Ws = image.shape
    vis = image.reshape(B, C, Hs * Ws).transpose(0, 2, 1)
    caption_tokens = batch["caption_tokens"]
    tgt_input = caption_tokens[:, :-1]
    tgt_output = caption_tokens[:, 1:]
    V, H = params["embed"].shape
    x = jnp.take(params["embed"], tgt_input, axis=0)
    k = vis @ params["wk"]
    v = vis @ params["wv"]
    q = x @ params["wq"]
    scores = jnp.einsum("bth,bnh->btn", q, k) / math.sqrt(H)
    attn = jax.nn.softmax(scores, axis=-1)
    ctx = jnp.einsum("btn,bnh->bth", attn, v)
    logits = (x + ctx) @ params["wo"]
    logp = jax.nn.log_softmax(logits, axis=-1)
    nll = -jnp.take_along_axis(logp, tgt_output[..., None], axis=-1)[..., 0]
    mask = (tgt_output != PAD_IDX).astype(jnp.float32)
    return jnp.sum(nll * mask) / jnp.maximum(jnp.sum(mask), 1.0)


if __name__ == "__main__":
    B, C, Hs, Ws = 4, 128, 8, 8        # channels on the lane axis -> lane-dense vis blocks
    VOCAB, HIDDEN = 256, 128
    L = 9                              # caption length -> tgt_input / tgt_output length 8

    key = jax.random.PRNGKey(0)
    k_img, k_tok, k_par = jax.random.split(key, 3)

    params = init_params(k_par, VOCAB, HIDDEN, C)

    image = jax.random.normal(k_img, (B, C, Hs, Ws), jnp.float32)
    caption_tokens = jax.random.randint(k_tok, (B, L), 3, VOCAB, dtype=jnp.int32)
    caption_tokens = caption_tokens.at[:, 0].set(SOS_IDX)
    caption_tokens = caption_tokens.at[:, L - 1].set(EOS_IDX)
    # pad the tail of the second caption to exercise ignore_index = padding_idx
    caption_tokens = caption_tokens.at[1, L - 3:].set(PAD_IDX)

    batch = {"image": image, "caption_tokens": caption_tokens}

    out = captioning_model_forward(params, batch, batch_block=2)  # 2 grid steps
    loss = jax.block_until_ready(out["loss"])

    ref = jax.block_until_ready(_reference_loss(params, batch))
    assert jnp.isfinite(loss), "loss is not finite"
    assert abs(float(loss) - float(ref)) <= 5e-2 * max(1.0, abs(float(ref))), \
        f"pallas loss {float(loss)} vs reference {float(ref)}"

    print("KERNEL_OK")
</pallas_src>

<mosaic_0001>
module attributes {stable_mosaic.version = 11 : i64} {
  func.func @_captioning_block_kernel(%arg0: i32, %arg1: memref<2x64x128xbf16, #tpu.memory_space<vmem>>, %arg2: memref<2x8x128xbf16, #tpu.memory_space<vmem>>, %arg3: memref<1x16x1xi32, #tpu.memory_space<vmem>>, %arg4: memref<128x128xbf16, #tpu.memory_space<vmem>>, %arg5: memref<128x128xbf16, #tpu.memory_space<vmem>>, %arg6: memref<128x128xbf16, #tpu.memory_space<vmem>>, %arg7: memref<128x256xbf16, #tpu.memory_space<vmem>>, %arg8: memref<1x8x128xf32, #tpu.memory_space<vmem>>) attributes {dimension_semantics = [#tpu.dimension_semantics<parallel>], iteration_bounds = array<i64: 2>, scalar_prefetch = 0 : i64, scratch_operands = 0 : i64, tpu.core_type = #tpu.core_type<tc>, window_params = [{transform_indices = @transform_0, window_bounds = array<i64: 2, 64, 128>}, {transform_indices = @transform_1, window_bounds = array<i64: 2, 8, 128>}, {transform_indices = @transform_2, window_bounds = array<i64: 1, 16, 1>}, {pipeline_mode = #tpu.pipeline_mode<synchronous>, transform_indices = @transform_3, window_bounds = array<i64: 128, 128>}, {pipeline_mode = #tpu.pipeline_mode<synchronous>, transform_indices = @transform_4, window_bounds = array<i64: 128, 128>}, {pipeline_mode = #tpu.pipeline_mode<synchronous>, transform_indices = @transform_5, window_bounds = array<i64: 128, 128>}, {pipeline_mode = #tpu.pipeline_mode<synchronous>, transform_indices = @transform_6, window_bounds = array<i64: 128, 256>}, {transform_indices = @transform_7, window_bounds = array<i64: 1, 8, 128>}]} {
    %c0 = arith.constant 0 : index
    %c0_0 = arith.constant 0 : index
    %c0_1 = arith.constant 0 : index
    %0 = vector.load %arg2[%c0, %c0_0, %c0_1] : memref<2x8x128xbf16, #tpu.memory_space<vmem>>, vector<2x8x128xbf16>
    %c0_2 = arith.constant 0 : index
    %c0_3 = arith.constant 0 : index
    %c0_4 = arith.constant 0 : index
    %1 = vector.load %arg1[%c0_2, %c0_3, %c0_4] : memref<2x64x128xbf16, #tpu.memory_space<vmem>>, vector<2x64x128xbf16>
    %2 = vector.shape_cast %1 : vector<2x64x128xbf16> to vector<128x128xbf16>
    %3 = vector.shape_cast %0 : vector<2x8x128xbf16> to vector<16x128xbf16>
    %c0_5 = arith.constant 0 : index
    %c0_6 = arith.constant 0 : index
    %4 = vector.load %arg4[%c0_5, %c0_6] : memref<128x128xbf16, #tpu.memory_space<vmem>>, vector<128x128xbf16>
    %cst = arith.constant dense<0.000000e+00> : vector<16x128xf32>
    %5 = tpu.matmul %3, %4, %cst {dimension_numbers = #tpu.dot_dimension_numbers<[1], [0], [0], [1], [0, 0, 1, 1], [], []>} : vector<16x128xbf16>, vector<128x128xbf16>, vector<16x128xf32> -> vector<16x128xf32>
    %6 = vector.shape_cast %5 : vector<16x128xf32> to vector<2x8x128xf32>
    %c0_7 = arith.constant 0 : index
    %c0_8 = arith.constant 0 : index
    %7 = vector.load %arg5[%c0_7, %c0_8] : memref<128x128xbf16, #tpu.memory_space<vmem>>, vector<128x128xbf16>
    %cst_9 = arith.constant dense<0.000000e+00> : vector<128x128xf32>
    %8 = tpu.matmul %2, %7, %cst_9 {dimension_numbers = #tpu.dot_dimension_numbers<[1], [0], [0], [1], [0, 0, 1, 1], [], []>} : vector<128x128xbf16>, vector<128x128xbf16>, vector<128x128xf32> -> vector<128x128xf32>
    %9 = vector.shape_cast %8 : vector<128x128xf32> to vector<2x64x128xf32>
    %c0_10 = arith.constant 0 : index
    %c0_11 = arith.constant 0 : index
    %10 = vector.load %arg6[%c0_10, %c0_11] : memref<128x128xbf16, #tpu.memory_space<vmem>>, vector<128x128xbf16>
    %cst_12 = arith.constant dense<0.000000e+00> : vector<128x128xf32>
    %11 = tpu.matmul %2, %10, %cst_12 {dimension_numbers = #tpu.dot_dimension_numbers<[1], [0], [0], [1], [0, 0, 1, 1], [], []>} : vector<128x128xbf16>, vector<128x128xbf16>, vector<128x128xf32> -> vector<128x128xf32>
    %12 = vector.shape_cast %11 : vector<128x128xf32> to vector<2x64x128xf32>
    %cst_13 = arith.constant 0.0883883461 : f32
    %13 = vector.broadcast %cst_13 : f32 to vector<2x8x128xf32>
    %14 = arith.mulf %6, %13 : vector<2x8x128xf32>
    %15 = arith.truncf %14 : vector<2x8x128xf32> to vector<2x8x128xbf16>
    %16 = arith.truncf %9 : vector<2x64x128xf32> to vector<2x64x128xbf16>
    "tpu.trace_start"() <{level = 10 : i32, message = "bth,bnh->btn"}> : () -> ()
    %cst_14 = arith.constant dense<0.000000e+00> : vector<2x8x64xf32>
    %17 = tpu.matmul %15, %16, %cst_14 {dimension_numbers = #tpu.dot_dimension_numbers<[2], [2], [1], [1], [0, 0, 0, 1, 1, 1], [0], [0]>} : vector<2x8x128xbf16>, vector<2x64x128xbf16>, vector<2x8x64xf32> -> vector<2x8x64xf32>
    "tpu.trace_stop"() : () -> ()
    %cst_15 = arith.constant dense<0xFF800000> : vector<2x8xf32>
    %18 = vector.multi_reduction <maximumf>, %17, %cst_15 [2] : vector<2x8x64xf32> to vector<2x8xf32>
    %19 = vector.shape_cast %18 : vector<2x8xf32> to vector<2x8x1xf32>
    %20 = vector.broadcast %19 : vector<2x8x1xf32> to vector<2x8x64xf32>
    %21 = arith.subf %17, %20 : vector<2x8x64xf32>
    %22 = math.exp %21 : vector<2x8x64xf32>
    %cst_16 = arith.constant dense<0.000000e+00> : vector<2x8xf32>
    %23 = vector.multi_reduction <add>, %22, %cst_16 [2] : vector<2x8x64xf32> to vector<2x8xf32>
    %24 = vector.shape_cast %23 : vector<2x8xf32> to vector<2x8x1xf32>
    %25 = tpu.reciprocal %24 {approx = true} : vector<2x8x1xf32> -> vector<2x8x1xf32>
    %26 = vector.broadcast %25 : vector<2x8x1xf32> to vector<2x8x64xf32>
    %27 = arith.mulf %22, %26 : vector<2x8x64xf32>
    %28 = arith.truncf %27 : vector<2x8x64xf32> to vector<2x8x64xbf16>
    %29 = arith.truncf %12 : vector<2x64x128xf32> to vector<2x64x128xbf16>
    "tpu.trace_start"() <{level = 10 : i32, message = "btn,bnh->bth"}> : () -> ()
    %cst_17 = arith.constant dense<0.000000e+00> : vector<2x8x128xf32>
    %30 = tpu.matmul %28, %29, %cst_17 {dimension_numbers = #tpu.dot_dimension_numbers<[2], [1], [1], [2], [0, 0, 0, 1, 1, 2], [0], [0]>} : vector<2x8x64xbf16>, vector<2x64x128xbf16>, vector<2x8x128xf32> -> vector<2x8x128xf32>
    "tpu.trace_stop"() : () -> ()
    %31 = arith.extf %0 : vector<2x8x128xbf16> to vector<2x8x128xf32>
    %32 = arith.addf %31, %30 : vector<2x8x128xf32>
    %33 = vector.shape_cast %32 : vector<2x8x128xf32> to vector<16x128xf32>
    %34 = arith.truncf %33 : vector<16x128xf32> to vector<16x128xbf16>
    %c0_18 = arith.constant 0 : index
    %c0_19 = arith.constant 0 : index
    %35 = vector.load %arg7[%c0_18, %c0_19] : memref<128x256xbf16, #tpu.memory_space<vmem>>, vector<128x256xbf16>
    %cst_20 = arith.constant dense<0.000000e+00> : vector<16x256xf32>
    %36 = tpu.matmul %34, %35, %cst_20 {dimension_numbers = #tpu.dot_dimension_numbers<[1], [0], [0], [1], [0, 0, 1, 1], [], []>} : vector<16x128xbf16>, vector<128x256xbf16>, vector<16x256xf32> -> vector<16x256xf32>
    %cst_21 = arith.constant dense<0xFF800000> : vector<16xf32>
    %37 = vector.multi_reduction <maximumf>, %36, %cst_21 [1] : vector<16x256xf32> to vector<16xf32>
    %38 = vector.shape_cast %37 : vector<16xf32> to vector<16x1xf32>
    %39 = vector.broadcast %38 : vector<16x1xf32> to vector<16x256xf32>
    %40 = arith.subf %36, %39 : vector<16x256xf32>
    %41 = math.exp %40 : vector<16x256xf32>
    %cst_22 = arith.constant dense<0.000000e+00> : vector<16xf32>
    %42 = vector.multi_reduction <add>, %41, %cst_22 [1] : vector<16x256xf32> to vector<16xf32>
    %43 = vector.shape_cast %42 : vector<16xf32> to vector<16x1xf32>
    %44 = math.log %43 : vector<16x1xf32>
    %45 = arith.addf %44, %38 : vector<16x1xf32>
    %46 = vector.broadcast %45 : vector<16x1xf32> to vector<16x256xf32>
    %47 = arith.subf %36, %46 : vector<16x256xf32>
    %c0_23 = arith.constant 0 : index
    %c0_24 = arith.constant 0 : index
    %c0_25 = arith.constant 0 : index
    %48 = vector.load %arg3[%c0_23, %c0_24, %c0_25] : memref<1x16x1xi32, #tpu.memory_space<vmem>>, vector<1x16x1xi32>
    %49 = vector.shape_cast %48 : vector<1x16x1xi32> to vector<16x1xi32>
    %50 = tpu.iota {dimensions = array<i32: 1>} : vector<16x256xi32>
    %c0_i32 = arith.constant 0 : i32
    %51 = vector.broadcast %c0_i32 : i32 to vector<16x1xi32>
    %52 = arith.cmpi ne, %49, %51 : vector<16x1xi32>
    %53 = vector.broadcast %49 : vector<16x1xi32> to vector<16x256xi32>
    %54 = arith.cmpi eq, %50, %53 : vector<16x256xi32>
    %55 = vector.broadcast %52 : vector<16x1xi1> to vector<16x256xi1>
    %56 = arith.andi %54, %55 : vector<16x256xi1>
    %cst_26 = arith.constant 0.000000e+00 : f32
    %57 = vector.broadcast %cst_26 : f32 to vector<16x256xf32>
    %58 = arith.select %56, %47, %57 : vector<16x256xi1>, vector<16x256xf32>
    %59 = vector.shape_cast %58 : vector<16x256xf32> to vector<1x16x256xf32>
    %cst_27 = arith.constant dense<0.000000e+00> : vector<1xf32>
    %60 = vector.multi_reduction <add>, %59, %cst_27 [1, 2] : vector<1x16x256xf32> to vector<1xf32>
    %61 = vector.shape_cast %60 : vector<1xf32> to vector<1x1x1xf32>
    %62 = vector.extract %61[0, 0, 0] : f32 from vector<1x1x1xf32>
    %cst_28 = arith.constant 0.000000e+00 : f32
    %63 = arith.subf %cst_28, %62 : f32
    %64 = arith.extui %52 : vector<16x1xi1> to vector<16x1xi32>
    %65 = arith.sitofp %64 : vector<16x1xi32> to vector<16x1xf32>
    %66 = vector.shape_cast %65 : vector<16x1xf32> to vector<1x16x1xf32>
    %cst_29 = arith.constant dense<0.000000e+00> : vector<1xf32>
    %67 = vector.multi_reduction <add>, %66, %cst_29 [1, 2] : vector<1x16x1xf32> to vector<1xf32>
    %68 = vector.shape_cast %67 : vector<1xf32> to vector<1x1x1xf32>
    %69 = vector.extract %68[0, 0, 0] : f32 from vector<1x1x1xf32>
    %70 = tpu.iota {dimensions = array<i32: 0>} : vector<8x128xi32>
    %71 = tpu.iota {dimensions = array<i32: 1>} : vector<8x128xi32>
    %c0_i32_30 = arith.constant 0 : i32
    %72 = vector.broadcast %c0_i32_30 : i32 to vector<8x128xi32>
    %73 = arith.cmpi eq, %70, %72 : vector<8x128xi32>
    %c0_i32_31 = arith.constant 0 : i32
    %74 = vector.broadcast %c0_i32_31 : i32 to vector<8x128xi32>
    %75 = arith.cmpi eq, %71, %74 : vector<8x128xi32>
    %76 = arith.andi %73, %75 : vector<8x128xi1>
    %cst_32 = arith.constant 0.000000e+00 : f32
    %77 = vector.broadcast %63 : f32 to vector<8x128xf32>
    %78 = vector.broadcast %cst_32 : f32 to vector<8x128xf32>
    %79 = arith.select %76, %77, %78 : vector<8x128xi1>, vector<8x128xf32>
    %c1_i32 = arith.constant 1 : i32
    %80 = vector.broadcast %c1_i32 : i32 to vector<8x128xi32>
    %81 = arith.cmpi eq, %70, %80 : vector<8x128xi32>
    %c0_i32_33 = arith.constant 0 : i32
    %82 = vector.broadcast %c0_i32_33 : i32 to vector<8x128xi32>
    %83 = arith.cmpi eq, %71, %82 : vector<8x128xi32>
    %84 = arith.andi %81, %83 : vector<8x128xi1>
    %cst_34 = arith.constant 0.000000e+00 : f32
    %85 = vector.broadcast %69 : f32 to vector<8x128xf32>
    %86 = vector.broadcast %cst_34 : f32 to vector<8x128xf32>
    %87 = arith.select %84, %85, %86 : vector<8x128xi1>, vector<8x128xf32>
    %88 = arith.addf %79, %87 : vector<8x128xf32>
    %c0_35 = arith.constant 0 : index
    %c0_36 = arith.constant 0 : index
    %c0_37 = arith.constant 0 : index
    %89 = vector.load %arg8[%c0_35, %c0_36, %c0_37] : memref<1x8x128xf32, #tpu.memory_space<vmem>>, vector<1x8x128xf32>
    %90 = vector.shape_cast %89 : vector<1x8x128xf32> to vector<8x128xf32>
    %91 = vector.shape_cast %88 : vector<8x128xf32> to vector<1x8x128xf32>
    tpu.vector_store %arg8[%c0_35, %c0_36, %c0_37], %91 {strides = array<i32>} : memref<1x8x128xf32, #tpu.memory_space<vmem>>, vector<1x8x128xf32>,
    return
  }
  func.func @transform_0(%arg0: i32) -> (i32, i32, i32) {
    %c0_i32 = arith.constant 0 : i32
    %c0_i32_0 = arith.constant 0 : i32
    %c0_i32_1 = arith.constant 0 : i32
    return %arg0, %c0_i32, %c0_i32_0 : i32, i32, i32
  }
  func.func @transform_1(%arg0: i32) -> (i32, i32, i32) {
    %c0_i32 = arith.constant 0 : i32
    %c0_i32_0 = arith.constant 0 : i32
    %c0_i32_1 = arith.constant 0 : i32
    return %arg0, %c0_i32, %c0_i32_0 : i32, i32, i32
  }
  func.func @transform_2(%arg0: i32) -> (i32, i32, i32) {
    %c0_i32 = arith.constant 0 : i32
    %c0_i32_0 = arith.constant 0 : i32
    %c0_i32_1 = arith.constant 0 : i32
    return %arg0, %c0_i32, %c0_i32_0 : i32, i32, i32
  }
  func.func @transform_3(%arg0: i32) -> (i32, i32) {
    %c0_i32 = arith.constant 0 : i32
    %c0_i32_0 = arith.constant 0 : i32
    %c0_i32_1 = arith.constant 0 : i32
    return %c0_i32, %c0_i32_0 : i32, i32
  }
  func.func @transform_4(%arg0: i32) -> (i32, i32) {
    %c0_i32 = arith.constant 0 : i32
    %c0_i32_0 = arith.constant 0 : i32
    %c0_i32_1 = arith.constant 0 : i32
    return %c0_i32, %c0_i32_0 : i32, i32
  }
  func.func @transform_5(%arg0: i32) -> (i32, i32) {
    %c0_i32 = arith.constant 0 : i32
    %c0_i32_0 = arith.constant 0 : i32
    %c0_i32_1 = arith.constant 0 : i32
    return %c0_i32, %c0_i32_0 : i32, i32
  }
  func.func @transform_6(%arg0: i32) -> (i32, i32) {
    %c0_i32 = arith.constant 0 : i32
    %c0_i32_0 = arith.constant 0 : i32
    %c0_i32_1 = arith.constant 0 : i32
    return %c0_i32, %c0_i32_0 : i32, i32
  }
  func.func @transform_7(%arg0: i32) -> (i32, i32, i32) {
    %c0_i32 = arith.constant 0 : i32
    %c0_i32_0 = arith.constant 0 : i32
    %c0_i32_1 = arith.constant 0 : i32
    return %arg0, %c0_i32, %c0_i32_0 : i32, i32, i32
  }
}

</mosaic_0001>

<llo_original>
// kernel: tpu_custom_call.1
$region0: #{tpu_custom_call.1}
  #allocation0 [shape = 'u32[]', space=smem, size = 0x4, offset = 0x4, fixed_abs, tag = 'smem constant byte address 0x4 - core index']
  #allocation1 [shape = 'u32[72,128]{1,0:T(1,128)}', space=vmem, size = 0x9000, scoped, tag = 'internal scratch']
  %s0 = inlined_call_operand.hbm [shape: bf16[4,64,128], index: 0, kind: input, shape index: {}]
  %s1 = inlined_call_operand.vmem [shape: bf16[4,8,128], index: 1, kind: input, shape index: {}]
  %s2 = inlined_call_operand.vmem [shape: s32[2,16,1], index: 2, kind: input, shape index: {}]
  %s3 = inlined_call_operand.hbm [shape: bf16[128,128], index: 3, kind: input, shape index: {}]
  %s4 = inlined_call_operand.hbm [shape: bf16[128,128], index: 4, kind: input, shape index: {}]
  %s5 = inlined_call_operand.hbm [shape: bf16[128,128], index: 5, kind: input, shape index: {}]
  %s6 = inlined_call_operand.hbm [shape: bf16[128,256], index: 6, kind: input, shape index: {}]
  %s7 = inlined_call_operand.hbm [shape: f32[2,8,128], index: 7, kind: output, shape index: {}]
  %s8 = sld [smem:[#allocation0]]
  $region81: #{tpu_custom_call.1} parent=0
    _
  %s10 = ssub.s32 1, %s8
  %s11 = scalar_select 0, %s10, %s8
  $region1: #{tpu_custom_call.1} parent=0
    #allocation2 [shape = 'u8[65536]{0}', space=vmem, size = 0x10000, scoped, tag = 'input window, operand 0']
    #allocation3 [shape = 's32[2]{0}', space=sflag, size = 0x8, scoped, tag = 'scoped memory for tpu_custom_call.1']
    #allocation4 [shape = 's32[2]{0}', space=sflag, size = 0x8, scoped, tag = 'scoped memory for tpu_custom_call.1']
    #allocation5 [shape = 'u8[32768]{0}', space=vmem, size = 0x8000, scoped, tag = 'input window, operand 3, single buffered']
    #allocation6 [shape = 's32[1]{0}', space=sflag, size = 0x4, scoped, tag = 'scoped memory for tpu_custom_call.1']
    #allocation7 [shape = 'u8[32768]{0}', space=vmem, size = 0x8000, scoped, tag = 'input window, operand 4, single buffered']
    #allocation8 [shape = 'u8[32768]{0}', space=vmem, size = 0x8000, scoped, tag = 'input window, operand 5, single buffered']
    #allocation9 [shape = 's32[1]{0}', space=sflag, size = 0x4, scoped, tag = 'scoped memory for tpu_custom_call.1']
    #allocation10 [shape = 'u8[65536]{0}', space=vmem, size = 0x10000, scoped, tag = 'input window, operand 6, single buffered']
    #allocation11 [shape = 'u8[8192]{0}', space=vmem, size = 0x2000, scoped, tag = 'output window, operand 0']
    %12 = vsyncpa [#allocation3], 0
    %s13 = scalar_lea.sflag [#allocation3], 1
    %14 = vsyncpa %s13, 0
    %15 = vsyncpa [#allocation6], 0
    %16 = vsyncpa [#allocation9], 0
    %17 = vsyncpa [#allocation4], 0
    %s18 = scalar_lea.sflag [#allocation4], 1
    %19 = vsyncpa %s18, 0
    loop: start=0, step=1, limit=4
    $region2: #{tpu_custom_call.1} parent=1 // loop_pre_header
      _
    $region3: #{tpu_custom_call.1} parent=1 // loop_header
      %s21 = sphi 0, %s25
      %p22 = scmp.ge.s32.totalorder %s21, 4
      %s31 = sphi 0, %s33
      %s34 = sphi 0, %s31
      %s35 = sphi 0, %s34
      %s51 = sphi 0, %s35
      %s57 = sphi 0, %s59
      %s60 = sphi 0, %s57
      %s61 = sphi 0, %s60
      %s77 = sphi 0, %s61
      %s83 = sphi 0, %s85
      %s86 = sphi 0, %s83
      %s87 = sphi 0, %s86
      %s103 = sphi 0, %s87
      %s107 = sphi 0, %s107
      %s109 = sphi 0, %s107
      %s110 = sphi 0, %s109
      %s124 = sphi 0, %s110
      %s128 = sphi 0, %s128
      %s130 = sphi 0, %s128
      %s131 = sphi 0, %s130
      %s145 = sphi 0, %s131
      %s149 = sphi 0, %s149
      %s151 = sphi 0, %s149
      %s152 = sphi 0, %s151
      %s166 = sphi 0, %s152
      %s170 = sphi 0, %s170
      %s172 = sphi 0, %s170
      %s173 = sphi 0, %s172
      %s187 = sphi 0, %s173
      %s193 = sphi 0, %s195
      %s196 = sphi 0, %s193
      %s197 = sphi 0, %s196
      %s213 = sphi 0, %s197
    $region4: #{tpu_custom_call.1} parent=1 // loop_header_branch
      %24 = sbr.rel (%p22) target = $region8
    $region5: #{tpu_custom_call.1} parent=1 // loop_body
      %s26 = ssub.s32 %s21, 1
      %s27 = ssub.s32 %s21, 2
      %s28 = sadd.s32 %s21, 1
      %s29 = ssub.s32 %s21, %s28
      %p30 = scmp.eq.s32.totalorder %s29, 0
      %s32 = sadd.s32 %s31, 1
      %s33 = scalar_select %p30, %s31, %s32
      %p36 = pneg %p30
      %p37 = scmp.eq.s32.totalorder %s21, 1
      %p38 = por %p36, %p37
      %p39 = scmp.ne.s32.totalorder %s31, %s34
      %p40 = scmp.eq.s32.totalorder %s21, 0
      %p41 = por %p39, %p40
      %p42 = scmp.ne.s32.totalorder %s31, %s34
      %p43 = scmp.eq.s32.totalorder %s26, 1
      %p44 = por %p42, %p43
      %p45 = scmp.ne.s32.totalorder %s34, %s35
      %p46 = scmp.eq.s32.totalorder %s26, 0
      %p47 = por %p45, %p46
      %p48 = scmp.ne.s32.totalorder %s34, %s35
      %p49 = scmp.eq.s32.totalorder %s27, 1
      %p50 = por %p48, %p49
      %p52 = scmp.ne.s32.totalorder %s35, %s51
      %p53 = scmp.eq.s32.totalorder %s27, 0
      %p54 = por %p52, %p53
      %s55 = ssub.s32 %s21, %s28
      %p56 = scmp.eq.s32.totalorder %s55, 0
      %s58 = sadd.s32 %s57, 1
      %s59 = scalar_select %p56, %s57, %s58
      %p62 = pneg %p56
      %p63 = scmp.eq.s32.totalorder %s21, 1
      %p64 = por %p62, %p63
      %p65 = scmp.ne.s32.totalorder %s57, %s60
      %p66 = scmp.eq.s32.totalorder %s21, 0
      %p67 = por %p65, %p66
      %p68 = scmp.ne.s32.totalorder %s57, %s60
      %p69 = scmp.eq.s32.totalorder %s26, 1
      %p70 = por %p68, %p69
      %p71 = scmp.ne.s32.totalorder %s60, %s61
      %p72 = scmp.eq.s32.totalorder %s26, 0
      %p73 = por %p71, %p72
      %p74 = scmp.ne.s32.totalorder %s60, %s61
      %p75 = scmp.eq.s32.totalorder %s27, 1
      %p76 = por %p74, %p75
      %p78 = scmp.ne.s32.totalorder %s61, %s77
      %p79 = scmp.eq.s32.totalorder %s27, 0
      %p80 = por %p78, %p79
      %s81 = ssub.s32 %s21, %s28
      %p82 = scmp.eq.s32.totalorder %s81, 0
      %s84 = sadd.s32 %s83, 1
      %s85 = scalar_select %p82, %s83, %s84
      %p88 = pneg %p82
      %p89 = scmp.eq.s32.totalorder %s21, 1
      %p90 = por %p88, %p89
      %p91 = scmp.ne.s32.totalorder %s83, %s86
      %p92 = scmp.eq.s32.totalorder %s21, 0
      %p93 = por %p91, %p92
      %p94 = scmp.ne.s32.totalorder %s83, %s86
      %p95 = scmp.eq.s32.totalorder %s26, 1
      %p96 = por %p94, %p95
      %p97 = scmp.ne.s32.totalorder %s86, %s87
      %p98 = scmp.eq.s32.totalorder %s26, 0
      %p99 = por %p97, %p98
      %p100 = scmp.ne.s32.totalorder %s86, %s87
      %p101 = scmp.eq.s32.totalorder %s27, 1
      %p102 = por %p100, %p101
      %p104 = scmp.ne.s32.totalorder %s87, %s103
      %p105 = scmp.eq.s32.totalorder %s27, 0
      %p106 = por %p104, %p105
      %s108 = sadd.s32 %s107, 1
      %p111 = scmp.eq.s32.totalorder %s21, 1
      %p112 = scmp.ne.s32.totalorder %s107, %s109
      %p113 = scmp.eq.s32.totalorder %s21, 0
      %p114 = por %p112, %p113
      %p115 = scmp.ne.s32.totalorder %s107, %s109
      %p116 = scmp.eq.s32.totalorder %s26, 1
      %p117 = por %p115, %p116
      %p118 = scmp.ne.s32.totalorder %s109, %s110
      %p119 = scmp.eq.s32.totalorder %s26, 0
      %p120 = por %p118, %p119
      %p121 = scmp.ne.s32.totalorder %s109, %s110
      %p122 = scmp.eq.s32.totalorder %s27, 1
      %p123 = por %p121, %p122
      %p125 = scmp.ne.s32.totalorder %s110, %s124
      %p126 = scmp.eq.s32.totalorder %s27, 0
      %p127 = por %p125, %p126
      %s129 = sadd.s32 %s128, 1
      %p132 = scmp.eq.s32.totalorder %s21, 1
      %p133 = scmp.ne.s32.totalorder %s128, %s130
      %p134 = scmp.eq.s32.totalorder %s21, 0
      %p135 = por %p133, %p134
      %p136 = scmp.ne.s32.totalorder %s128, %s130
      %p137 = scmp.eq.s32.totalorder %s26, 1
      %p138 = por %p136, %p137
      %p139 = scmp.ne.s32.totalorder %s130, %s131
      %p140 = scmp.eq.s32.totalorder %s26, 0
      %p141 = por %p139, %p140
      %p142 = scmp.ne.s32.totalorder %s130, %s131
      %p143 = scmp.eq.s32.totalorder %s27, 1
      %p144 = por %p142, %p143
      %p146 = scmp.ne.s32.totalorder %s131, %s145
      %p147 = scmp.eq.s32.totalorder %s27, 0
      %p148 = por %p146, %p147
      %s150 = sadd.s32 %s149, 1
      %p153 = scmp.eq.s32.totalorder %s21, 1
      %p154 = scmp.ne.s32.totalorder %s149, %s151
      %p155 = scmp.eq.s32.totalorder %s21, 0
      %p156 = por %p154, %p155
      %p157 = scmp.ne.s32.totalorder %s149, %s151
      %p158 = scmp.eq.s32.totalorder %s26, 1
      %p159 = por %p157, %p158
      %p160 = scmp.ne.s32.totalorder %s151, %s152
      %p161 = scmp.eq.s32.totalorder %s26, 0
      %p162 = por %p160, %p161
      %p163 = scmp.ne.s32.totalorder %s151, %s152
      %p164 = scmp.eq.s32.totalorder %s27, 1
      %p165 = por %p163, %p164
      %p167 = scmp.ne.s32.totalorder %s152, %s166
      %p168 = scmp.eq.s32.totalorder %s27, 0
      %p169 = por %p167, %p168
      %s171 = sadd.s32 %s170, 1
      %p174 = scmp.eq.s32.totalorder %s21, 1
      %p175 = scmp.ne.s32.totalorder %s170, %s172
      %p176 = scmp.eq.s32.totalorder %s21, 0
      %p177 = por %p175, %p176
      %p178 = scmp.ne.s32.totalorder %s170, %s172
      %p179 = scmp.eq.s32.totalorder %s26, 1
      %p180 = por %p178, %p179
      %p181 = scmp.ne.s32.totalorder %s172, %s173
      %p182 = scmp.eq.s32.totalorder %s26, 0
      %p183 = por %p181, %p182
      %p184 = scmp.ne.s32.totalorder %s172, %s173
      %p185 = scmp.eq.s32.totalorder %s27, 1
      %p186 = por %p184, %p185
      %p188 = scmp.ne.s32.totalorder %s173, %s187
      %p189 = scmp.eq.s32.totalorder %s27, 0
      %p190 = por %p188, %p189
      %s191 = ssub.s32 %s21, %s28
      %p192 = scmp.eq.s32.totalorder %s191, 0
      %s194 = sadd.s32 %s193, 1
      %s195 = scalar_select %p192, %s193, %s194
      %p198 = pneg %p192
      %p199 = scmp.eq.s32.totalorder %s21, 1
      %p200 = por %p198, %p199
      %p201 = scmp.ne.s32.totalorder %s193, %s196
      %p202 = scmp.eq.s32.totalorder %s21, 0
      %p203 = por %p201, %p202
      %p204 = scmp.ne.s32.totalorder %s193, %s196
      %p205 = scmp.eq.s32.totalorder %s26, 1
      %p206 = por %p204, %p205
      %p207 = scmp.ne.s32.totalorder %s196, %s197
      %p208 = scmp.eq.s32.totalorder %s26, 0
      %p209 = por %p207, %p208
      %p210 = scmp.ne.s32.totalorder %s196, %s197
      %p211 = scmp.eq.s32.totalorder %s27, 1
      %p212 = por %p210, %p211
      %p214 = scmp.ne.s32.totalorder %s197, %s213
      %p215 = scmp.eq.s32.totalorder %s27, 0
      %p216 = por %p214, %p215
      %p217 = scmp.le.s32.totalorder 1, %s21
      %p218 = scmp.lt.s32.totalorder %s21, 3
      %p219 = pnand %p217, %p218
      %p220 = pneg %p219
      // Predicated region
      $region9: #{tpu_custom_call.1} parent=5 // pred_check
        _
      $region10: #{tpu_custom_call.1} parent=5 // pred_check_branch
        %222 = sbr.rel (%p219) target = $region12
      $region11: #{tpu_custom_call.1} parent=5 // pred_region
        %s223 = ssub.s32 %s21, 1
        // Predicated region
        $region13: #{tpu_custom_call.1} parent=11 // pred_check
          %p224 = pneg %p120
        $region14: #{tpu_custom_call.1} parent=11 // pred_check_branch
          %226 = sbr.rel (%p224) target = $region16
        $region15: #{tpu_custom_call.1} parent=11 // pred_region
          %228 = vsyncadd [#allocation6], 0
          %s229 = sshll.u32 %s3, 4
          %s230 = int_to_ptr.hbm [resolvable:$true] %s229
          %s231 = sshll.u32 [#allocation5], 4
          %s232 = int_to_ptr.vmem [resolvable:$true] %s231
          %237 = dma.hbm_to_vmem [thread:$0]  %s230, 1024, %s232, [#allocation6], 64, 64, 4
        $region16: #{tpu_custom_call.1} parent=11 // pred_fallthru
          _
        // Predicated region
        $region17: #{tpu_custom_call.1} parent=11 // pred_check
          %p238 = pneg %p141
        $region18: #{tpu_custom_call.1} parent=11 // pred_check_branch
          %240 = sbr.rel (%p238) target = $region20
        $region19: #{tpu_custom_call.1} parent=11 // pred_region
          %242 = vsyncadd [#allocation6], 0
          %s243 = sshll.u32 %s4, 4
          %s244 = int_to_ptr.hbm [resolvable:$true] %s243
          %s245 = sshll.u32 [#allocation7], 4
          %s246 = int_to_ptr.vmem [resolvable:$true] %s245
          %251 = dma.hbm_to_vmem [thread:$0]  %s244, 1024, %s246, [#allocation6], 64, 64, 4
        $region20: #{tpu_custom_call.1} parent=11 // pred_fallthru
          _
        // Predicated region
        $region21: #{tpu_custom_call.1} parent=11 // pred_check
          %p252 = pneg %p162
        $region22: #{tpu_custom_call.1} parent=11 // pred_check_branch
          %254 = sbr.rel (%p252) target = $region24
        $region23: #{tpu_custom_call.1} parent=11 // pred_region
          %256 = vsyncadd [#allocation9], 0
          %s257 = sshll.u32 %s5, 4
          %s258 = int_to_ptr.hbm [resolvable:$true] %s257
          %s259 = sshll.u32 [#allocation8], 4
          %s260 = int_to_ptr.vmem [resolvable:$true] %s259
          %265 = dma.hbm_to_vmem [thread:$0]  %s258, 1024, %s260, [#allocation9], 64, 64, 4
        $region24: #{tpu_custom_call.1} parent=11 // pred_fallthru
          _
        // Predicated region
        $region25: #{tpu_custom_call.1} parent=11 // pred_check
          %p266 = pneg %p183
        $region26: #{tpu_custom_call.1} parent=11 // pred_check_branch
          %268 = sbr.rel (%p266) target = $region28
        $region27: #{tpu_custom_call.1} parent=11 // pred_region
          %270 = vsyncadd [#allocation9], 0
          %s271 = sshll.u32 %s6, 4
          %s272 = int_to_ptr.hbm [resolvable:$true] %s271
          %s273 = sshll.u32 [#allocation10], 4
          %s274 = int_to_ptr.vmem [resolvable:$true] %s273
          %279 = dma.hbm_to_vmem [thread:$0]  %s272, 2048, %s274, [#allocation9], 128, 128, 8
        $region28: #{tpu_custom_call.1} parent=11 // pred_fallthru
          _
      $region12: #{tpu_custom_call.1} parent=5 // pred_fallthru
        _
      %p280 = scmp.lt.s32.totalorder %s21, 2
      // Predicated region
      $region29: #{tpu_custom_call.1} parent=5 // pred_check
        %p281 = pneg %p280
      $region30: #{tpu_custom_call.1} parent=5 // pred_check_branch
        %283 = sbr.rel (%p281) target = $region32
      $region31: #{tpu_custom_call.1} parent=5 // pred_region
        // Predicated region
        $region33: #{tpu_custom_call.1} parent=31 // pred_check
          %p284 = pneg %p41
        $region34: #{tpu_custom_call.1} parent=31 // pred_check_branch
          %286 = sbr.rel (%p284) target = $region36
        $region35: #{tpu_custom_call.1} parent=31 // pred_region
          %s287 = sand.u32 %s31, 1
          %s288 = scalar_lea.sflag [#allocation3], %s287
          %s289 = sand.u32 %s31, 1
          %s290 = smul.addr %s289, 64
          %s291 = scalar_lea.vmem [#allocation2], %s290
          %s292 = smul.u32 2, %s21
          %294 = vsyncadd %s288, 0
          %s295 = smul.addr %s292, 8
          %s296 = smul.addr %s295, 4
          %s297 = scalar_lea.hbm %s0, %s296
          %s298 = sshll.u32 %s297, 4
          %s299 = int_to_ptr.hbm [resolvable:$true] %s298
          %s300 = sshll.u32 %s291, 4
          %s301 = int_to_ptr.vmem [resolvable:$true] %s300
          %306 = dma.hbm_to_vmem [thread:$0]  %s299, 1024, %s301, %s288, 64, 64, 4
        $region36: #{tpu_custom_call.1} parent=31 // pred_fallthru
          _
        // Predicated region
        $region37: #{tpu_custom_call.1} parent=31 // pred_check
          %p307 = pneg %p67
        $region38: #{tpu_custom_call.1} parent=31 // pred_check_branch
          %309 = sbr.rel (%p307) target = $region40
        $region39: #{tpu_custom_call.1} parent=31 // pred_region
          %s310 = smul.u32 2, %s21
          %p311 = scmp.lt.s32.totalorder %s310, 3
          %s312 = scalar_select %p311, %s310, 3
          %s313 = smul.addr %s312, 4
          %s314 = scalar_lea.vmem %s1, %s313
          %s315 = smul.u32 2, %s21
        $region40: #{tpu_custom_call.1} parent=31 // pred_fallthru
          _
        // Predicated region
        $region41: #{tpu_custom_call.1} parent=31 // pred_check
          %p316 = pneg %p93
        $region42: #{tpu_custom_call.1} parent=31 // pred_check_branch
          %318 = sbr.rel (%p316) target = $region44
        $region43: #{tpu_custom_call.1} parent=31 // pred_region
          %p319 = scmp.lt.s32.totalorder %s21, 1
          %s320 = scalar_select %p319, %s21, 1
          %s321 = smul.addr %s320, 2
          %s322 = smul.addr %s321, 8
          %s323 = scalar_lea.vmem %s2, %s322
        $region44: #{tpu_custom_call.1} parent=31 // pred_fallthru
          _
      $region32: #{tpu_custom_call.1} parent=5 // pred_fallthru
        _
      %p324 = scmp.le.s32.totalorder 1, %s21
      %p325 = scmp.lt.s32.totalorder %s21, 3
      %p326 = pnand %p324, %p325
      %p327 = pneg %p326
      // Predicated region
      $region45: #{tpu_custom_call.1} parent=5 // pred_check
        _
      $region46: #{tpu_custom_call.1} parent=5 // pred_check_branch
        %329 = sbr.rel (%p326) target = $region48
      $region47: #{tpu_custom_call.1} parent=5 // pred_region
        %s330 = ssub.s32 %s21, 1
        %s331 = sand.u32 %s34, 1
        %s332 = scalar_lea.sflag [#allocation3], %s331
        %s333 = sand.u32 %s34, 1
        %s334 = smul.addr %s333, 64
        %s335 = scalar_lea.vmem [#allocation2], %s334
        // Predicated region
        $region49: #{tpu_custom_call.1} parent=47 // pred_check
          %p336 = pneg %p47
        $region50: #{tpu_custom_call.1} parent=47 // pred_check_branch
          %338 = sbr.rel (%p336) target = $region52
        $region51: #{tpu_custom_call.1} parent=47 // pred_region
          %340 = dma.done %s332, 1024
        $region52: #{tpu_custom_call.1} parent=47 // pred_fallthru
          _
        // Predicated region
        $region53: #{tpu_custom_call.1} parent=47 // pred_check
          %p341 = pneg %p120
        $region54: #{tpu_custom_call.1} parent=47 // pred_check_branch
          %343 = sbr.rel (%p341) target = $region56
        $region55: #{tpu_custom_call.1} parent=47 // pred_region
          %345 = dma.done [#allocation6], 1024
        $region56: #{tpu_custom_call.1} parent=47 // pred_fallthru
          _
        // Predicated region
        $region57: #{tpu_custom_call.1} parent=47 // pred_check
          %p346 = pneg %p141
        $region58: #{tpu_custom_call.1} parent=47 // pred_check_branch
          %348 = sbr.rel (%p346) target = $region60
        $region59: #{tpu_custom_call.1} parent=47 // pred_region
          %350 = dma.done [#allocation6], 1024
        $region60: #{tpu_custom_call.1} parent=47 // pred_fallthru
          _
        // Predicated region
        $region61: #{tpu_custom_call.1} parent=47 // pred_check
          %p351 = pneg %p162
        $region62: #{tpu_custom_call.1} parent=47 // pred_check_branch
          %353 = sbr.rel (%p351) target = $region64
        $region63: #{tpu_custom_call.1} parent=47 // pred_region
          %355 = dma.done [#allocation9], 1024
        $region64: #{tpu_custom_call.1} parent=47 // pred_fallthru
          _
        // Predicated region
        $region65: #{tpu_custom_call.1} parent=47 // pred_check
          %p356 = pneg %p183
        $region66: #{tpu_custom_call.1} parent=47 // pred_check_branch
          %358 = sbr.rel (%p356) target = $region68
        $region67: #{tpu_custom_call.1} parent=47 // pred_region
          %360 = dma.done [#allocation9], 2048
        $region68: #{tpu_custom_call.1} parent=47 // pred_fallthru
          _
        %s361 = sand.u32 %s34, 1
        %s362 = scalar_lea.sflag [#allocation3], %s361
        %s363 = sand.u32 %s34, 1
        %s364 = smul.addr %s363, 64
        %s365 = scalar_lea.vmem [#allocation2], %s364
        %p366 = pneg %p47
        %p367 = pneg %p44
        %s368 = smul.u32 2, %s26
        %p369 = scmp.lt.s32.totalorder %s368, 3
        %s370 = scalar_select %p369, %s368, 3
        %s371 = smul.addr %s370, 4
        %s372 = scalar_lea.vmem %s1, %s371
        %p373 = pneg %p73
        %p374 = pneg %p70
        %p375 = scmp.lt.s32.totalorder %s26, 1
        %s376 = scalar_select %p375, %s26, 1
        %s377 = smul.addr %s376, 2
        %s378 = smul.addr %s377, 8
        %s379 = scalar_lea.vmem %s2, %s378
        %p380 = pneg %p99
        %p381 = pneg %p96
        %p382 = pneg %p120
        %p383 = pneg %p117
        %p384 = pneg %p141
        %p385 = pneg %p138
        %p386 = pneg %p162
        %p387 = pneg %p159
        %p388 = pneg %p183
        %p389 = pneg %p180
        %p390 = pneg %p209
        %p391 = pneg %p206
        %s392 = sand.u32 %s196, 1
        %s393 = scalar_lea.sflag [#allocation4], %s392
        %s394 = sand.u32 %s196, 1
        %s395 = smul.addr %s394, 8
        %s396 = scalar_lea.vmem [#allocation11], %s395
        %s397 = smul.u32 2, %s26
        %s398 = smul.u32 2, %s26
        %p399 = scmp.lt.s32.totalorder %s398, 3
        %s400 = scalar_select %p399, %s398, 3
        %s401 = smul.addr %s400, 4
        %s402 = scalar_lea.vmem %s1, %s401
        %s403 = smul.u32 2, %s26
        %p404 = scmp.lt.s32.totalorder %s26, 1
        %s405 = scalar_select %p404, %s26, 1
        %s406 = smul.addr %s405, 2
        %s407 = smul.addr %s406, 8
        %s408 = scalar_lea.vmem %s2, %s407
        %v410 = vld [vmem:[%s402] sm:$0xf]
        %v411 = vld [vmem:[%s402 + $0x4] sm:$0xf]
        %v412 = vld [vmem:[%s335] sm:$0xf]
        %v413 = vld [vmem:[%s335 + $0x4] sm:$0xf]
        %v414 = vld [vmem:[%s335 + $0x8] sm:$0xf]
        %v415 = vld [vmem:[%s335 + $0xc] sm:$0xf]
        %v416 = vld [vmem:[%s335 + $0x10] sm:$0xf]
        %v417 = vld [vmem:[%s335 + $0x14] sm:$0xf]
        %v418 = vld [vmem:[%s335 + $0x18] sm:$0xf]
        %v419 = vld [vmem:[%s335 + $0x1c] sm:$0xf]
        %v420 = vld [vmem:[%s335 + $0x20] sm:$0xf]
        %v421 = vld [vmem:[%s335 + $0x24] sm:$0xf]
        %v422 = vld [vmem:[%s335 + $0x28] sm:$0xf]
        %v423 = vld [vmem:[%s335 + $0x2c] sm:$0xf]
        %v424 = vld [vmem:[%s335 + $0x30] sm:$0xf]
        %v425 = vld [vmem:[%s335 + $0x34] sm:$0xf]
        %v426 = vld [vmem:[%s335 + $0x38] sm:$0xf]
        %v427 = vld [vmem:[%s335 + $0x3c] sm:$0xf]
        %v428 = vld [vmem:[#allocation5] sm:$0xf]
        %v429 = vld [vmem:[#allocation5 + $0x4] sm:$0xf]
        %v430 = vld [vmem:[#allocation5 + $0x8] sm:$0xf]
        %v431 = vld [vmem:[#allocation5 + $0xc] sm:$0xf]
        %v432 = vld [vmem:[#allocation5 + $0x10] sm:$0xf]
        %v433 = vld [vmem:[#allocation5 + $0x14] sm:$0xf]
        %v434 = vld [vmem:[#allocation5 + $0x18] sm:$0xf]
        %v435 = vld [vmem:[#allocation5 + $0x1c] sm:$0xf]
        %v436 = vld [vmem:[#allocation5 + $0x20] sm:$0xf]
        %v437 = vld [vmem:[#allocation5 + $0x24] sm:$0xf]
        %v438 = vld [vmem:[#allocation5 + $0x28] sm:$0xf]
        %v439 = vld [vmem:[#allocation5 + $0x2c] sm:$0xf]
        %v440 = vld [vmem:[#allocation5 + $0x30] sm:$0xf]
        %v441 = vld [vmem:[#allocation5 + $0x34] sm:$0xf]
        %v442 = vld [vmem:[#allocation5 + $0x38] sm:$0xf]
        %v443 = vld [vmem:[#allocation5 + $0x3c] sm:$0xf]
        %v446 = vunpack.c.l.b16 %v410
        %v447 = vunpack.c.l.b16 %v411
        %v448 = vpack.c.b16 %v447, %v446
        %v466 = vunpack.c.l.b16 %v428
        %v467 = vunpack.c.l.b16 %v429
        %v468 = vunpack.c.l.b16 %v430
        %v469 = vunpack.c.l.b16 %v431
        %v470 = vunpack.c.l.b16 %v432
        %v471 = vunpack.c.l.b16 %v433
        %v472 = vunpack.c.l.b16 %v434
        %v473 = vunpack.c.l.b16 %v435
        %v474 = vunpack.c.l.b16 %v436
        %v475 = vunpack.c.l.b16 %v437
        %v476 = vunpack.c.l.b16 %v438
        %v477 = vunpack.c.l.b16 %v439
        %v478 = vunpack.c.l.b16 %v440
        %v479 = vunpack.c.l.b16 %v441
        %v480 = vunpack.c.l.b16 %v442
        %v481 = vunpack.c.l.b16 %v443
        %v482 = vpack.c.b16 %v467, %v466
        %v483 = vpack.c.b16 %v469, %v468
        %v484 = vpack.c.b16 %v471, %v470
        %v485 = vpack.c.b16 %v473, %v472
        %v486 = vpack.c.b16 %v475, %v474
        %v487 = vpack.c.b16 %v477, %v476
        %v488 = vpack.c.b16 %v479, %v478
        %v489 = vpack.c.b16 %v481, %v480
        %498 = vmatpush.bf16.msra.mxu0 %v489
        %499 = vmatpush.bf16.msra.mxu0 %v488
        %500 = vmatpush.bf16.msra.mxu0 %v487
        %501 = vmatpush.bf16.msra.mxu0 %v486
        %502 = vmatpush.bf16.msra.mxu0 %v485
        %503 = vmatpush.bf16.msra.mxu0 %v484
        %504 = vmatpush.bf16.msra.mxu0 %v483
        %505 = vmatpush.bf16.msra.mxu0 %v482
        %506 = vmatmul.bf16.gmra.mxu0 %v448
        %v507 = vpop.f32.mrf.mxu0
        %v508 = vadd.f32 0.0, %v507
        %v509 = vpop.f32.mrf.mxu0
        %v510 = vadd.f32 0.0, %v509
        %511 = vdwg.mxu0
        %v512 = vld [vmem:[#allocation7] sm:$0xf]
        %v513 = vld [vmem:[#allocation7 + $0x4] sm:$0xf]
        %v514 = vld [vmem:[#allocation7 + $0x8] sm:$0xf]
        %v515 = vld [vmem:[#allocation7 + $0xc] sm:$0xf]
        %v516 = vld [vmem:[#allocation7 + $0x10] sm:$0xf]
        %v517 = vld [vmem:[#allocation7 + $0x14] sm:$0xf]
        %v518 = vld [vmem:[#allocation7 + $0x18] sm:$0xf]
        %v519 = vld [vmem:[#allocation7 + $0x1c] sm:$0xf]
        %v520 = vld [vmem:[#allocation7 + $0x20] sm:$0xf]
        %v521 = vld [vmem:[#allocation7 + $0x24] sm:$0xf]
        %v522 = vld [vmem:[#allocation7 + $0x28] sm:$0xf]
        %v523 = vld [vmem:[#allocation7 + $0x2c] sm:$0xf]
        %v524 = vld [vmem:[#allocation7 + $0x30] sm:$0xf]
        %v525 = vld [vmem:[#allocation7 + $0x34] sm:$0xf]
        %v526 = vld [vmem:[#allocation7 + $0x38] sm:$0xf]
        %v527 = vld [vmem:[#allocation7 + $0x3c] sm:$0xf]
        %v544 = vunpack.c.l.b16 %v412
        %v545 = vunpack.c.l.b16 %v413
        %v546 = vunpack.c.l.b16 %v414
        %v547 = vunpack.c.l.b16 %v415
        %v548 = vunpack.c.l.b16 %v416
        %v549 = vunpack.c.l.b16 %v417
        %v550 = vunpack.c.l.b16 %v418
        %v551 = vunpack.c.l.b16 %v419
        %v552 = vunpack.c.l.b16 %v420
        %v553 = vunpack.c.l.b16 %v421
        %v554 = vunpack.c.l.b16 %v422
        %v555 = vunpack.c.l.b16 %v423
        %v556 = vunpack.c.l.b16 %v424
        %v557 = vunpack.c.l.b16 %v425
        %v558 = vunpack.c.l.b16 %v426
        %v559 = vunpack.c.l.b16 %v427
        %v560 = vpack.c.b16 %v545, %v544
        %v561 = vpack.c.b16 %v547, %v546
        %v562 = vpack.c.b16 %v549, %v548
        %v563 = vpack.c.b16 %v551, %v550
        %v564 = vpack.c.b16 %v553, %v552
        %v565 = vpack.c.b16 %v555, %v554
        %v566 = vpack.c.b16 %v557, %v556
        %v567 = vpack.c.b16 %v559, %v558
        %v592 = vunpack.c.l.b16 %v512
        %v593 = vunpack.c.l.b16 %v513
        %v594 = vunpack.c.l.b16 %v514
        %v595 = vunpack.c.l.b16 %v515
        %v596 = vunpack.c.l.b16 %v516
        %v597 = vunpack.c.l.b16 %v517
        %v598 = vunpack.c.l.b16 %v518
        %v599 = vunpack.c.l.b16 %v519
        %v600 = vunpack.c.l.b16 %v520
        %v601 = vunpack.c.l.b16 %v521
        %v602 = vunpack.c.l.b16 %v522
        %v603 = vunpack.c.l.b16 %v523
        %v604 = vunpack.c.l.b16 %v524
        %v605 = vunpack.c.l.b16 %v525
        %v606 = vunpack.c.l.b16 %v526
        %v607 = vunpack.c.l.b16 %v527
        %v608 = vpack.c.b16 %v593, %v592
        %v609 = vpack.c.b16 %v595, %v594
        %v610 = vpack.c.b16 %v597, %v596
        %v611 = vpack.c.b16 %v599, %v598
        %v612 = vpack.c.b16 %v601, %v600
        %v613 = vpack.c.b16 %v603, %v602
        %v614 = vpack.c.b16 %v605, %v604
        %v615 = vpack.c.b16 %v607, %v606
        %624 = vmatpush.bf16.msra.mxu0 %v615
        %625 = vmatpush.bf16.msra.mxu0 %v614
        %626 = vmatpush.bf16.msra.mxu0 %v613
        %627 = vmatpush.bf16.msra.mxu0 %v612
        %628 = vmatpush.bf16.msra.mxu0 %v611
        %629 = vmatpush.bf16.msra.mxu0 %v610
        %630 = vmatpush.bf16.msra.mxu0 %v609
        %631 = vmatpush.bf16.msra.mxu0 %v608
        %632 = vmatmul.bf16.gmra.mxu0 %v560
        %v633 = vpop.f32.mrf.mxu0
        %v634 = vadd.f32 0.0, %v633
        %v635 = vpop.f32.mrf.mxu0
        %v636 = vadd.f32 0.0, %v635
        %637 = vmatmul.bf16.gmra.mxu0 %v561
        %v638 = vpop.f32.mrf.mxu0
        %v639 = vadd.f32 0.0, %v638
        %v640 = vpop.f32.mrf.mxu0
        %v641 = vadd.f32 0.0, %v640
        %642 = vmatmul.bf16.gmra.mxu0 %v562
        %v643 = vpop.f32.mrf.mxu0
        %v644 = vadd.f32 0.0, %v643
        %v645 = vpop.f32.mrf.mxu0
        %v646 = vadd.f32 0.0, %v645
        %647 = vmatmul.bf16.gmra.mxu0 %v563
        %v648 = vpop.f32.mrf.mxu0
        %v649 = vadd.f32 0.0, %v648
        %v650 = vpop.f32.mrf.mxu0
        %v651 = vadd.f32 0.0, %v650
        %652 = vmatmul.bf16.gmra.mxu0 %v564
        %v653 = vpop.f32.mrf.mxu0
        %v654 = vadd.f32 0.0, %v653
        %v655 = vpop.f32.mrf.mxu0
        %v656 = vadd.f32 0.0, %v655
        %657 = vmatmul.bf16.gmra.mxu0 %v565
        %v658 = vpop.f32.mrf.mxu0
        %v659 = vadd.f32 0.0, %v658
        %v660 = vpop.f32.mrf.mxu0
        %v661 = vadd.f32 0.0, %v660
        %662 = vmatmul.bf16.gmra.mxu0 %v566
        %v663 = vpop.f32.mrf.mxu0
        %v664 = vadd.f32 0.0, %v663
        %v665 = vpop.f32.mrf.mxu0
        %v666 = vadd.f32 0.0, %v665
        %667 = vmatmul.bf16.gmra.mxu0 %v567
        %v668 = vpop.f32.mrf.mxu0
        %v669 = vadd.f32 0.0, %v668
        %v670 = vpop.f32.mrf.mxu0
        %v671 = vadd.f32 0.0, %v670
        %672 = vdwg.mxu0
        %v673 = vld [vmem:[#allocation8] sm:$0xf]
        %v674 = vld [vmem:[#allocation8 + $0x4] sm:$0xf]
        %v675 = vld [vmem:[#allocation8 + $0x8] sm:$0xf]
        %v676 = vld [vmem:[#allocation8 + $0xc] sm:$0xf]
        %v677 = vld [vmem:[#allocation8 + $0x10] sm:$0xf]
        %v678 = vld [vmem:[#allocation8 + $0x14] sm:$0xf]
        %v679 = vld [vmem:[#allocation8 + $0x18] sm:$0xf]
        %v680 = vld [vmem:[#allocation8 + $0x1c] sm:$0xf]
        %v681 = vld [vmem:[#allocation8 + $0x20] sm:$0xf]
        %v682 = vld [vmem:[#allocation8 + $0x24] sm:$0xf]
        %v683 = vld [vmem:[#allocation8 + $0x28] sm:$0xf]
        %v684 = vld [vmem:[#allocation8 + $0x2c] sm:$0xf]
        %v685 = vld [vmem:[#allocation8 + $0x30] sm:$0xf]
        %v686 = vld [vmem:[#allocation8 + $0x34] sm:$0xf]
        %v687 = vld [vmem:[#allocation8 + $0x38] sm:$0xf]
        %v688 = vld [vmem:[#allocation8 + $0x3c] sm:$0xf]
        %v705 = vunpack.c.l.b16 %v673
        %v706 = vunpack.c.l.b16 %v674
        %v707 = vunpack.c.l.b16 %v675
        %v708 = vunpack.c.l.b16 %v676
        %v709 = vunpack.c.l.b16 %v677
        %v710 = vunpack.c.l.b16 %v678
        %v711 = vunpack.c.l.b16 %v679
        %v712 = vunpack.c.l.b16 %v680
        %v713 = vunpack.c.l.b16 %v681
        %v714 = vunpack.c.l.b16 %v682
        %v715 = vunpack.c.l.b16 %v683
        %v716 = vunpack.c.l.b16 %v684
        %v717 = vunpack.c.l.b16 %v685
        %v718 = vunpack.c.l.b16 %v686
        %v719 = vunpack.c.l.b16 %v687
        %v720 = vunpack.c.l.b16 %v688
        %v721 = vpack.c.b16 %v706, %v705
        %v722 = vpack.c.b16 %v708, %v707
        %v723 = vpack.c.b16 %v710, %v709
        %v724 = vpack.c.b16 %v712, %v711
        %v725 = vpack.c.b16 %v714, %v713
        %v726 = vpack.c.b16 %v716, %v715
        %v727 = vpack.c.b16 %v718, %v717
        %v728 = vpack.c.b16 %v720, %v719
        %737 = vmatpush.bf16.msra.mxu0 %v728
        %738 = vmatpush.bf16.msra.mxu0 %v727
        %739 = vmatpush.bf16.msra.mxu0 %v726
        %740 = vmatpush.bf16.msra.mxu0 %v725
        %741 = vmatpush.bf16.msra.mxu0 %v724
        %742 = vmatpush.bf16.msra.mxu0 %v723
        %743 = vmatpush.bf16.msra.mxu0 %v722
        %744 = vmatpush.bf16.msra.mxu0 %v721
        %745 = vmatmul.bf16.gmra.mxu0 %v560
        %v746 = vpop.f32.mrf.mxu0
        %v747 = vadd.f32 0.0, %v746
        %v748 = vpop.f32.mrf.mxu0
        %v749 = vadd.f32 0.0, %v748
        %750 = vmatmul.bf16.gmra.mxu0 %v561
        %v751 = vpop.f32.mrf.mxu0
        %v752 = vadd.f32 0.0, %v751
        %v753 = vpop.f32.mrf.mxu0
        %v754 = vadd.f32 0.0, %v753
        %755 = vmatmul.bf16.gmra.mxu0 %v562
        %v756 = vpop.f32.mrf.mxu0
        %v757 = vadd.f32 0.0, %v756
        %v758 = vpop.f32.mrf.mxu0
        %v759 = vadd.f32 0.0, %v758
        %760 = vmatmul.bf16.gmra.mxu0 %v563
        %v761 = vpop.f32.mrf.mxu0
        %v762 = vadd.f32 0.0, %v761
        %v763 = vpop.f32.mrf.mxu0
        %v764 = vadd.f32 0.0, %v763
        %765 = vmatmul.bf16.gmra.mxu0 %v564
        %v766 = vpop.f32.mrf.mxu0
        %v767 = vadd.f32 0.0, %v766
        %v768 = vpop.f32.mrf.mxu0
        %v769 = vadd.f32 0.0, %v768
        %770 = vmatmul.bf16.gmra.mxu0 %v565
        %v771 = vpop.f32.mrf.mxu0
        %v772 = vadd.f32 0.0, %v771
        %v773 = vpop.f32.mrf.mxu0
        %v774 = vadd.f32 0.0, %v773
        %775 = vmatmul.bf16.gmra.mxu0 %v566
        %v776 = vpop.f32.mrf.mxu0
        %v777 = vadd.f32 0.0, %v776
        %v778 = vpop.f32.mrf.mxu0
        %v779 = vadd.f32 0.0, %v778
        %780 = vmatmul.bf16.gmra.mxu0 %v567
        %v781 = vpop.f32.mrf.mxu0
        %v782 = vadd.f32 0.0, %v781
        %v783 = vpop.f32.mrf.mxu0
        %v784 = vadd.f32 0.0, %v783
        %785 = vdwg.mxu0
        %v786 = vmul.f32 %v508, 0.088388346
        %v787 = vmul.f32 %v510, 0.088388346
        %v788 = vpack.c.bf16 %v786, %v786
        %v789 = vpack.c.bf16 %v787, %v787
        %v790 = vpack.c.bf16 %v634, %v634
        %v791 = vpack.c.bf16 %v636, %v636
        %v792 = vpack.c.bf16 %v639, %v639
        %v793 = vpack.c.bf16 %v641, %v641
        %v794 = vpack.c.bf16 %v644, %v644
        %v795 = vpack.c.bf16 %v646, %v646
        %v796 = vpack.c.bf16 %v649, %v649
        %v797 = vpack.c.bf16 %v651, %v651
        %v798 = vpack.c.bf16 %v654, %v654
        %v799 = vpack.c.bf16 %v656, %v656
        %v800 = vpack.c.bf16 %v659, %v659
        %v801 = vpack.c.bf16 %v661, %v661
        %v802 = vpack.c.bf16 %v664, %v664
        %v803 = vpack.c.bf16 %v666, %v666
        %v804 = vpack.c.bf16 %v669, %v669
        %v805 = vpack.c.bf16 %v671, %v671
        %v814 = vunpack.c.l.b16 %v790
        %v815 = vunpack.c.l.b16 %v791
        %v816 = vunpack.c.l.b16 %v792
        %v817 = vunpack.c.l.b16 %v793
        %v818 = vunpack.c.l.b16 %v794
        %v819 = vunpack.c.l.b16 %v795
        %v820 = vunpack.c.l.b16 %v796
        %v821 = vunpack.c.l.b16 %v797
        %v822 = vpack.c.b16 %v815, %v814
        %v823 = vpack.c.b16 %v817, %v816
        %v824 = vpack.c.b16 %v819, %v818
        %v825 = vpack.c.b16 %v821, %v820
        %830 = vmatpush.bf16.xpose.msra.mxu0 0
        %831 = vmatpush.bf16.xpose.msra.mxu0 0
        %832 = vmatpush.bf16.xpose.msra.mxu0 0
        %833 = vmatpush.bf16.xpose.msra.mxu0 0
        %834 = vmatpush.bf16.xpose.msra.mxu0 %v825
        %835 = vmatpush.bf16.xpose.msra.mxu0 %v824
        %836 = vmatpush.bf16.xpose.msra.mxu0 %v823
        %837 = vmatpush.bf16.xpose.msra.mxu0 %v822
        %838 = vmatmul.bf16.gmra.mxu0 %v788
        %v839 = vpop.f32.mrf.mxu0
        %v840 = vadd.f32 0.0, %v839
        %v841 = vpop.f32.mrf.mxu0
        %842 = vdwg.mxu0
        %v851 = vunpack.c.l.b16 %v798
        %v852 = vunpack.c.l.b16 %v799
        %v853 = vunpack.c.l.b16 %v800
        %v854 = vunpack.c.l.b16 %v801
        %v855 = vunpack.c.l.b16 %v802
        %v856 = vunpack.c.l.b16 %v803
        %v857 = vunpack.c.l.b16 %v804
        %v858 = vunpack.c.l.b16 %v805
        %v859 = vpack.c.b16 %v852, %v851
        %v860 = vpack.c.b16 %v854, %v853
        %v861 = vpack.c.b16 %v856, %v855
        %v862 = vpack.c.b16 %v858, %v857
        %867 = vmatpush.bf16.xpose.msra.mxu0 0
        %868 = vmatpush.bf16.xpose.msra.mxu0 0
        %869 = vmatpush.bf16.xpose.msra.mxu0 0
        %870 = vmatpush.bf16.xpose.msra.mxu0 0
        %871 = vmatpush.bf16.xpose.msra.mxu0 %v862
        %872 = vmatpush.bf16.xpose.msra.mxu0 %v861
        %873 = vmatpush.bf16.xpose.msra.mxu0 %v860
        %874 = vmatpush.bf16.xpose.msra.mxu0 %v859
        %875 = vmatmul.bf16.gmra.mxu0 %v789
        %v876 = vpop.f32.mrf.mxu0
        %v877 = vadd.f32 0.0, %v876
        %v878 = vpop.f32.mrf.mxu0
        %879 = vdwg.mxu0
        %vm880 = vcmask 523264
        %v881 = vsel %vm880, %v840, -inf
        %882 = vmax.xlane.f32.xlu0 %v881
        %v883 = vpop.xlane.xlu0 %882
        %v884 = vsel %vm880, %v877, -inf
        %885 = vmax.xlane.f32.xlu0 %v884
        %v886 = vpop.xlane.xlu0 %885
        %v887 = vsub.f32 %v840, %v883
        %v888 = vsub.f32 %v877, %v886
        %v889 = vmul.f32 %v887, 1.442695
        %v890 = vpow.pop %v889
        %v891 = vmul.f32 %v888, 1.442695
        %v892 = vpow.pop %v891
        %v893 = vsel %vm880, %v890, 0.0
        %894 = vadd.xlane.f32.xlu0 %v893
        %v895 = vpop.xlane.xlu0 %894
        %v896 = vsel %vm880, %v892, 0.0
        %897 = vadd.xlane.f32.xlu0 %v896
        %v898 = vpop.xlane.xlu0 %897
        %v899 = vrcp.pop %v895
        %v900 = vrcp.pop %v898
        %v901 = vmul.f32 %v890, %v899
        %v902 = vmul.f32 %v892, %v900
        %v903 = vpack.c.bf16 %v901, %v901
        %v904 = vpack.c.bf16 %v902, %v902
        %v905 = vpack.c.bf16 %v747, %v747
        %v906 = vpack.c.bf16 %v749, %v749
        %v907 = vpack.c.bf16 %v752, %v752
        %v908 = vpack.c.bf16 %v754, %v754
        %v909 = vpack.c.bf16 %v757, %v757
        %v910 = vpack.c.bf16 %v759, %v759
        %v911 = vpack.c.bf16 %v762, %v762
        %v912 = vpack.c.bf16 %v764, %v764
        %v913 = vpack.c.bf16 %v767, %v767
        %v914 = vpack.c.bf16 %v769, %v769
        %v915 = vpack.c.bf16 %v772, %v772
        %v916 = vpack.c.bf16 %v774, %v774
        %v917 = vpack.c.bf16 %v777, %v777
        %v918 = vpack.c.bf16 %v779, %v779
        %v919 = vpack.c.bf16 %v782, %v782
        %v920 = vpack.c.bf16 %v784, %v784
        %v929 = vunpack.c.l.b16 %v905
        %v930 = vunpack.c.l.b16 %v906
        %v931 = vunpack.c.l.b16 %v907
        %v932 = vunpack.c.l.b16 %v908
        %v933 = vunpack.c.l.b16 %v909
        %v934 = vunpack.c.l.b16 %v910
        %v935 = vunpack.c.l.b16 %v911
        %v936 = vunpack.c.l.b16 %v912
        %v937 = vpack.c.b16 %v930, %v929
        %v938 = vpack.c.b16 %v932, %v931
        %v939 = vpack.c.b16 %v934, %v933
        %v940 = vpack.c.b16 %v936, %v935
        %v946 = vsel %vm880, %v903, 0
        %948 = vmatpush.bf16.msra.mxu0 0
        %949 = vmatpush.bf16.msra.mxu0 0
        %950 = vmatpush.bf16.msra.mxu0 0
        %951 = vmatpush.bf16.msra.mxu0 0
        %952 = vmatpush.bf16.msra.mxu0 %v940
        %953 = vmatpush.bf16.msra.mxu0 %v939
        %954 = vmatpush.bf16.msra.mxu0 %v938
        %955 = vmatpush.bf16.msra.mxu0 %v937
        %956 = vmatmul.bf16.gmra.mxu0 %v946
        %v957 = vpop.f32.mrf.mxu0
        %v958 = vadd.f32 0.0, %v957
        %v959 = vpop.f32.mrf.mxu0
        %960 = vdwg.mxu0
        %v969 = vunpack.c.l.b16 %v913
        %v970 = vunpack.c.l.b16 %v914
        %v971 = vunpack.c.l.b16 %v915
        %v972 = vunpack.c.l.b16 %v916
        %v973 = vunpack.c.l.b16 %v917
        %v974 = vunpack.c.l.b16 %v918
        %v975 = vunpack.c.l.b16 %v919
        %v976 = vunpack.c.l.b16 %v920
        %v977 = vpack.c.b16 %v970, %v969
        %v978 = vpack.c.b16 %v972, %v971
        %v979 = vpack.c.b16 %v974, %v973
        %v980 = vpack.c.b16 %v976, %v975
        %v986 = vsel %vm880, %v904, 0
        %988 = vmatpush.bf16.msra.mxu0 0
        %989 = vmatpush.bf16.msra.mxu0 0
        %990 = vmatpush.bf16.msra.mxu0 0
        %991 = vmatpush.bf16.msra.mxu0 0
        %992 = vmatpush.bf16.msra.mxu0 %v980
        %993 = vmatpush.bf16.msra.mxu0 %v979
        %994 = vmatpush.bf16.msra.mxu0 %v978
        %995 = vmatpush.bf16.msra.mxu0 %v977
        %996 = vmatmul.bf16.gmra.mxu0 %v986
        %v997 = vpop.f32.mrf.mxu0
        %v998 = vadd.f32 0.0, %v997
        %v999 = vpop.f32.mrf.mxu0
        %1000 = vdwg.mxu0
        %v1001 = vunpack.c.l.bf16 %v410
        %v1002 = vunpack.c.l.bf16 %v411
        %v1003 = vadd.f32 %v1001, %v958
        %v1004 = vadd.f32 %v1002, %v998
        %v1005 = vpack.c.bf16 %v1004, %v1003
        %v1006 = vld [vmem:[#allocation10] sm:$0xff]
        %v1007 = vld [vmem:[#allocation10 + $0x8] sm:$0xff]
        %v1008 = vld [vmem:[#allocation10 + $0x10] sm:$0xff]
        %v1009 = vld [vmem:[#allocation10 + $0x18] sm:$0xff]
        %v1010 = vld [vmem:[#allocation10 + $0x20] sm:$0xff]
        %v1011 = vld [vmem:[#allocation10 + $0x28] sm:$0xff]
        %v1012 = vld [vmem:[#allocation10 + $0x30] sm:$0xff]
        %v1013 = vld [vmem:[#allocation10 + $0x38] sm:$0xff]
        %v1014 = vld [vmem:[#allocation10 + $0x40] sm:$0xff]
        %v1015 = vld [vmem:[#allocation10 + $0x48] sm:$0xff]
        %v1016 = vld [vmem:[#allocation10 + $0x50] sm:$0xff]
        %v1017 = vld [vmem:[#allocation10 + $0x58] sm:$0xff]
        %v1018 = vld [vmem:[#allocation10 + $0x60] sm:$0xff]
        %v1019 = vld [vmem:[#allocation10 + $0x68] sm:$0xff]
        %v1020 = vld [vmem:[#allocation10 + $0x70] sm:$0xff]
        %v1021 = vld [vmem:[#allocation10 + $0x78] sm:$0xff]
        %v1038 = vunpack.c.l.b16 %v1006
        %v1039 = vunpack.c.h.b16 %v1006
        %v1040 = vunpack.c.l.b16 %v1007
        %v1041 = vunpack.c.h.b16 %v1007
        %v1042 = vunpack.c.l.b16 %v1008
        %v1043 = vunpack.c.h.b16 %v1008
        %v1044 = vunpack.c.l.b16 %v1009
        %v1045 = vunpack.c.h.b16 %v1009
        %v1046 = vunpack.c.l.b16 %v1010
        %v1047 = vunpack.c.h.b16 %v1010
        %v1048 = vunpack.c.l.b16 %v1011
        %v1049 = vunpack.c.h.b16 %v1011
        %v1050 = vunpack.c.l.b16 %v1012
        %v1051 = vunpack.c.h.b16 %v1012
        %v1052 = vunpack.c.l.b16 %v1013
        %v1053 = vunpack.c.h.b16 %v1013
        %v1054 = vunpack.c.l.b16 %v1014
        %v1055 = vunpack.c.h.b16 %v1014
        %v1056 = vunpack.c.l.b16 %v1015
        %v1057 = vunpack.c.h.b16 %v1015
        %v1058 = vunpack.c.l.b16 %v1016
        %v1059 = vunpack.c.h.b16 %v1016
        %v1060 = vunpack.c.l.b16 %v1017
        %v1061 = vunpack.c.h.b16 %v1017
        %v1062 = vunpack.c.l.b16 %v1018
        %v1063 = vunpack.c.h.b16 %v1018
        %v1064 = vunpack.c.l.b16 %v1019
        %v1065 = vunpack.c.h.b16 %v1019
        %v1066 = vunpack.c.l.b16 %v1020
        %v1067 = vunpack.c.h.b16 %v1020
        %v1068 = vunpack.c.l.b16 %v1021
        %v1069 = vunpack.c.h.b16 %v1021
        %v1070 = vpack.c.b16 %v1040, %v1038
        %v1071 = vpack.c.b16 %v1041, %v1039
        %v1072 = vpack.c.b16 %v1044, %v1042
        %v1073 = vpack.c.b16 %v1045, %v1043
        %v1074 = vpack.c.b16 %v1048, %v1046
        %v1075 = vpack.c.b16 %v1049, %v1047
        %v1076 = vpack.c.b16 %v1052, %v1050
        %v1077 = vpack.c.b16 %v1053, %v1051
        %v1078 = vpack.c.b16 %v1056, %v1054
        %v1079 = vpack.c.b16 %v1057, %v1055
        %v1080 = vpack.c.b16 %v1060, %v1058
        %v1081 = vpack.c.b16 %v1061, %v1059
        %v1082 = vpack.c.b16 %v1064, %v1062
        %v1083 = vpack.c.b16 %v1065, %v1063
        %v1084 = vpack.c.b16 %v1068, %v1066
        %v1085 = vpack.c.b16 %v1069, %v1067
        %1102 = vmatpush.bf16.msra.mxu0 %v1084
        %1103 = vmatpush.bf16.msra.mxu0 %v1082
        %1104 = vmatpush.bf16.msra.mxu0 %v1080
        %1105 = vmatpush.bf16.msra.mxu0 %v1078
        %1106 = vmatpush.bf16.msra.mxu0 %v1076
        %1107 = vmatpush.bf16.msra.mxu0 %v1074
        %1108 = vmatpush.bf16.msra.mxu0 %v1072
        %1109 = vmatpush.bf16.msra.mxu0 %v1070
        %1110 = vmatmul.bf16.gmra.mxu0 %v1005
        %v1111 = vpop.f32.mrf.mxu0
        %v1112 = vadd.f32 0.0, %v1111
        %v1113 = vpop.f32.mrf.mxu0
        %v1114 = vadd.f32 0.0, %v1113
        %1115 = vdwg.mxu0
        %1116 = vmatpush.bf16.msra.mxu0 %v1085
        %1117 = vmatpush.bf16.msra.mxu0 %v1083
        %1118 = vmatpush.bf16.msra.mxu0 %v1081
        %1119 = vmatpush.bf16.msra.mxu0 %v1079
        %1120 = vmatpush.bf16.msra.mxu0 %v1077
        %1121 = vmatpush.bf16.msra.mxu0 %v1075
        %1122 = vmatpush.bf16.msra.mxu0 %v1073
        %1123 = vmatpush.bf16.msra.mxu0 %v1071
        %1124 = vmatmul.bf16.gmra.mxu0 %v1005
        %v1125 = vpop.f32.mrf.mxu0
        %v1126 = vadd.f32 0.0, %v1125
        %v1127 = vpop.f32.mrf.mxu0
        %v1128 = vadd.f32 0.0, %v1127
        %1129 = vdwg.mxu0
        %v1130 = vmax.f32 %v1112, %v1126
        %1131 = vmax.xlane.f32.xlu0 %v1130
        %v1132 = vpop.xlane.xlu0 %1131
        %v1133 = vmax.f32 %v1114, %v1128
        %1134 = vmax.xlane.f32.xlu0 %v1133
        %v1135 = vpop.xlane.xlu0 %1134
        %v1136 = vsub.f32 %v1112, %v1132
        %v1137 = vsub.f32 %v1126, %v1132
        %v1138 = vsub.f32 %v1114, %v1135
        %v1139 = vsub.f32 %v1128, %v1135
        %v1140 = vmul.f32 %v1136, 1.442695
        %v1141 = vpow.pop %v1140
        %v1142 = vmul.f32 %v1137, 1.442695
        %v1143 = vpow.pop %v1142
        %v1144 = vmul.f32 %v1138, 1.442695
        %v1145 = vpow.pop %v1144
        %v1146 = vmul.f32 %v1139, 1.442695
        %v1147 = vpow.pop %v1146
        %v1148 = vadd.f32 %v1141, %v1143
        %1149 = vadd.xlane.f32.xlu0 %v1148
        %v1150 = vpop.xlane.xlu0 %1149
        %v1151 = vadd.f32 %v1145, %v1147
        %1152 = vadd.xlane.f32.xlu0 %v1151
        %v1153 = vpop.xlane.xlu0 %1152
        %v1154 = vlog2.pop %v1150
        %v1155 = vmul.f32 %v1154, 0.6931472
        %v1156 = vlog2.pop %v1153
        %v1157 = vmul.f32 %v1156, 0.6931472
        %v1158 = vadd.f32 %v1155, %v1132
        %v1159 = vadd.f32 %v1157, %v1135
        %v1160 = vsub.f32 %v1112, %v1158
        %v1161 = vsub.f32 %v1126, %v1158
        %v1162 = vsub.f32 %v1114, %v1159
        %v1163 = vsub.f32 %v1128, %v1159
        %v1164 = vld [vmem:[%s408] sm:$0xff]
        %v1165 = vld [vmem:[%s408 + $0x8] sm:$0xff]
        %v1166 = vlaneseq
        %v1167 = vand.u32 %v1166, 127
        %v1168 = vadd.s32 %v1167, 128
        %vm1169 = vcmp.ne.s32.totalorder %v1164, 0
        %vm1170 = vcmp.ne.s32.totalorder %v1165, 0
        %1171 = vset.pattern.permute.xlu0 0
        %1172 = vperm.xlu0 %1171, %v1164
        %v1173 = vpop.permute.xlu0 %1172
        %1174 = vset.pattern.permute.xlu0 0
        %1175 = vperm.xlu0 %1174, %v1165
        %v1176 = vpop.permute.xlu0 %1175
        %vm1177 = vcmp.eq.s32.totalorder %v1167, %v1173
        %vm1178 = vcmp.eq.s32.totalorder %v1168, %v1173
        %vm1179 = vcmp.eq.s32.totalorder %v1167, %v1176
        %vm1180 = vcmp.eq.s32.totalorder %v1168, %v1176
        %v1181 = vsel %vm1169, 1, 0
        %v1182 = vsel %vm1170, 1, 0
        %1183 = vset.pattern.permute.xlu0 0
        %1184 = vperm.xlu0 %1183, %v1181
        %v1185 = vpop.permute.xlu0 %1184
        %1186 = vset.pattern.permute.xlu0 0
        %1187 = vperm.xlu0 %1186, %v1182
        %v1188 = vpop.permute.xlu0 %1187
        %vm1189 = vcmp.eq.s32.totalorder %v1185, 1
        %vm1190 = vcmp.eq.s32.totalorder %v1188, 1
        %vm1191 = vmand %vm1177, %vm1189
        %vm1192 = vmand %vm1178, %vm1189
        %vm1193 = vmand %vm1179, %vm1190
        %vm1194 = vmand %vm1180, %vm1190
        %v1195 = vsel %vm1191, %v1160, 0.0
        %v1196 = vsel %vm1192, %v1161, 0.0
        %v1197 = vsel %vm1193, %v1162, 0.0
        %v1198 = vsel %vm1194, %v1163, 0.0
        %v1199 = vadd.f32 %v1195, %v1196
        %v1200 = vadd.f32 %v1199, %v1197
        %v1201 = vadd.f32 %v1200, %v1198
        %1202 = vadd.xlane.f32.xlu0 %v1201
        %v1203 = vpop.xlane.xlu0 %1202
        %v1204 = vrot.slane %v1203, 4
        %v1205 = vadd.f32 %v1203, %v1204
        %v1206 = vrot.slane %v1205, 2
        %v1207 = vadd.f32 %v1205, %v1206
        %v1208 = vrot.slane %v1207, 1
        %v1209 = vadd.f32 %v1207, %v1208
        %s1210 = vtos %v1209
        %s1211 = ssub.f32 0.0, %s1210
        %v1212 = vcvt.s32.f32 %v1181
        %v1213 = vcvt.s32.f32 %v1182
        %vm1214 = vcmask 7168
        %v1215 = vsel %vm1214, %v1212, 0.0
        %v1216 = vsel %vm1214, %v1213, 0.0
        %v1217 = vadd.f32 %v1215, %v1216
        %1218 = vadd.xlane.f32.xlu0 %v1217
        %v1219 = vpop.xlane.xlu0 %1218
        %v1220 = vrot.slane %v1219, 4
        %v1221 = vadd.f32 %v1219, %v1220
        %v1222 = vrot.slane %v1221, 2
        %v1223 = vadd.f32 %v1221, %v1222
        %v1224 = vrot.slane %v1223, 1
        %v1225 = vadd.f32 %v1223, %v1224
        %s1226 = vtos %v1225
        %v1227 = vlaneseq
        %v1228 = vshrl.u32 %v1227, 7
        %vm1229 = vcmp.eq.s32.totalorder %v1228, 0
        %vm1230 = vcmp.eq.s32.totalorder %v1167, 0
        %vm1231 = vmand %vm1229, %vm1230
        %v1232 = vstv %s1211
        %v1233 = vsel %vm1231, %v1232, 0.0
        %vm1234 = vcmp.eq.s32.totalorder %v1228, 1
        %vm1235 = vmand %vm1234, %vm1230
        %v1236 = vstv %s1226
        %v1237 = vsel %vm1235, %v1236, 0.0
        %v1238 = vadd.f32 %v1233, %v1237
        %1239 = vst [vmem:[%s396] sm:$0xff] %v1238
        %s1240 = sand.u32 %s196, 1
        %s1241 = scalar_lea.sflag [#allocation4], %s1240
        %s1242 = sand.u32 %s196, 1
        %s1243 = smul.addr %s1242, 8
        %s1244 = scalar_lea.vmem [#allocation11], %s1243
        // Predicated region
        $region69: #{tpu_custom_call.1} parent=47 // pred_check
          %p1245 = pneg %p206
        $region70: #{tpu_custom_call.1} parent=47 // pred_check_branch
          %1247 = sbr.rel (%p1245) target = $region72
        $region71: #{tpu_custom_call.1} parent=47 // pred_region
          %1249 = vsyncadd %s1241, 0
          %s1250 = smul.addr %s26, 8
          %s1251 = scalar_lea.hbm %s7, %s1250
          %s1253 = sshll.u32 %s1244, 4
          %s1254 = int_to_ptr.vmem [resolvable:$true] %s1253
          %s1255 = sshll.u32 %s1251, 4
          %s1256 = int_to_ptr.hbm [resolvable:$true] %s1255
          %1258 = dma.vmem_to_hbm [thread:$0]  %s1254, 128, %s1256, %s1241
        $region72: #{tpu_custom_call.1} parent=47 // pred_fallthru
          _
      $region48: #{tpu_custom_call.1} parent=5 // pred_fallthru
        _
      %p1259 = scmp.le.s32.totalorder 2, %s21
      // Predicated region
      $region73: #{tpu_custom_call.1} parent=5 // pred_check
        %p1260 = pneg %p1259
      $region74: #{tpu_custom_call.1} parent=5 // pred_check_branch
        %1262 = sbr.rel (%p1260) target = $region76
      $region75: #{tpu_custom_call.1} parent=5 // pred_region
        %s1263 = ssub.s32 %s21, 2
        // Predicated region
        $region77: #{tpu_custom_call.1} parent=75 // pred_check
          %p1264 = pneg %p212
        $region78: #{tpu_custom_call.1} parent=75 // pred_check_branch
          %1266 = sbr.rel (%p1264) target = $region80
        $region79: #{tpu_custom_call.1} parent=75 // pred_region
          %s1267 = sand.u32 %s197, 1
          %s1268 = scalar_lea.sflag [#allocation4], %s1267
          %s1269 = sand.u32 %s197, 1
          %s1270 = smul.addr %s1269, 8
          %s1271 = scalar_lea.vmem [#allocation11], %s1270
          %1273 = dma.done %s1268, 128
        $region80: #{tpu_custom_call.1} parent=75 // pred_fallthru
          _
      $region76: #{tpu_custom_call.1} parent=5 // pred_fallthru
        _
    $region6: #{tpu_custom_call.1} parent=1 // loop_footer
      %s25 = sadd.s32 1, %s21
    $region7: #{tpu_custom_call.1} parent=1 // loop_footer_branch
      %20 = sbr.rel target = $region3
    $region8: #{tpu_custom_call.1} parent=1 // loop_exit
      _
    %1274 = vsyncpa [#allocation3], 1
    %s1275 = scalar_lea.sflag [#allocation3], 1
    %1276 = vsyncpa %s1275, 1
    %1277 = vsyncpa [#allocation6], 1
    %1278 = vsyncpa [#allocation9], 1
    %1279 = vsyncpa [#allocation4], 1
    %s1280 = scalar_lea.sflag [#allocation4], 1
    %1281 = vsyncpa %s1280, 1

</llo_original>
